<compile_context>
chip_gen: v5e
topology: v5e:2x2
jax: 0.10.0
libtpu: 0.0.40
codegen_flags: <defaults>
</compile_context>

<pallas_src>
import functools
import math

import jax
import jax.numpy as jnp
from jax.experimental import pallas as pl
from jax.experimental.pallas import tpu as pltpu


def _round_up(x, m):
    return ((x + m - 1) // m) * m


def dropout_kernel(seed_ref, x_ref, o_ref, *, tn, threshold, inv_p):
    # seed_ref: SMEM (1,) int32 scalar-prefetch ; x_ref/o_ref: VMEM (TB, TN)
    # Global flattened (C*H*W) position of every lane in this tile.  The mask
    # depends only on this position + the seed (never on the batch block), so
    # it is identical for every batch row (reference semantics) and can be
    # regenerated independently on any core / grid step.
    col0 = (pl.program_id(1) * tn).astype(jnp.uint32)
    idx = jax.lax.broadcasted_iota(jnp.int32, (1, tn), 1).astype(jnp.uint32) + col0

    seed_u = seed_ref[0].astype(jnp.uint32)

    # lowbias32-style counter hash mixed with the seed (pure VPU ops; fully
    # hidden under the HBM DMA for this memory-bound kernel).
    h = idx * jnp.uint32(0x9E3779B9) + seed_u * jnp.uint32(0x85EBCA6B)
    h = h ^ (h >> 16)
    h = h * jnp.uint32(0x7FEB352D)
    h = h ^ (h >> 15)
    h = h * jnp.uint32(0x846CA68B)
    h = h ^ (h >> 16)

    bits31 = (h >> 1).astype(jnp.int32)          # uniform in [0, 2^31)
    keep = bits31 < jnp.int32(threshold)         # P(keep) == p
    mask = jnp.where(keep, jnp.float32(inv_p), jnp.float32(0.0))

    # (TB, TN) * (1, TN): sublane broadcast of the shared mask over the batch
    # rows; scale in f32 then cast back (matches torch's f32 mask scaling).
    o_ref[...] = (x_ref[...].astype(jnp.float32) * mask).astype(o_ref.dtype)


def _choose_tiles(B, N, itemsize):
    """Pick (tb, tn) tile sizes (elements), VMEM-budgeted and layout-legal."""
    # dtype-native sublane packing: f32 -> 8, bf16 -> 16, int8/fp8 -> 32.
    sub = {4: 8, 2: 16, 1: 32}.get(itemsize, 8)
    # Moderate lane extent (multiple of 128) keeps the (1, tn) u32 hash slab
    # in a handful of partially-filled vregs; grow the block along tb instead.
    tn = min(2048, _round_up(N, 128))
    # Grow tb toward a ~2 MiB block (4x with double-buffered in+out is ~8 MiB,
    # inside the scoped-VMEM defaults of v5e/v6e/v7x) to amortize the
    # ~0.35 us per-grid-step overhead.
    target_bytes = 2 << 20
    rows = max(sub, (target_bytes // (tn * itemsize)) // sub * sub)
    tb = min(_round_up(B, sub), rows)
    # If the whole batch already fits in one block and it is still small,
    # widen the lanes (up to 4096) to keep amortizing per-step overhead.
    if tb == _round_up(B, sub) and tb * tn * itemsize < (1 << 20):
        tn = min(_round_up(N, 128), 4096)
    # v7x has 2 TensorCores sharing HBM: prefer >= 2 blocks on a parallel axis.
    if pl.cdiv(B, tb) * pl.cdiv(N, tn) < 2:
        if pl.cdiv(B, sub) >= 2:
            tb = _round_up(pl.cdiv(B, 2), sub)
        elif pl.cdiv(N, 128) >= 2:
            tn = _round_up(pl.cdiv(N, 2), 128)
    return tb, tn


def dropout(x, p, seed=0):
    """x: (B, ...). Returns x * mask, mask shape x.shape[1:], shared over B."""
    p = float(p)
    if p >= 1.0:
        # rand() in [0, 1) < p is always true: mask == 1/p everywhere.
        return x * jnp.asarray(1.0 / p, x.dtype)
    if p <= 0.0:
        # TODO(synk): reference (rand < 0)/0 yields NaN (0/0); we return zeros.
        return jnp.zeros_like(x)

    B = x.shape[0]
    N = math.prod(x.shape[1:])                  # lane-dense flattened feature dim
    x2 = x.reshape(B, N)

    tb, tn = _choose_tiles(B, N, jnp.dtype(x.dtype).itemsize)
    grid = (pl.cdiv(B, tb), pl.cdiv(N, tn))     # padded edge blocks are safe here

    threshold = min(int(round(p * (1 << 31))), (1 << 31) - 1)
    inv_p = 1.0 / p

    kernel = functools.partial(
        dropout_kernel, tn=tn, threshold=threshold, inv_p=inv_p
    )
    seed_arr = jnp.array([seed], dtype=jnp.int32)

    out = pl.pallas_call(
        kernel,
        out_shape=jax.ShapeDtypeStruct((B, N), x.dtype),
        grid_spec=pltpu.PrefetchScalarGridSpec(
            num_scalar_prefetch=1,
            grid=grid,
            in_specs=[pl.BlockSpec((tb, tn), lambda b, j, seed: (b, j))],
            out_specs=pl.BlockSpec((tb, tn), lambda b, j, seed: (b, j)),
        ),
        compiler_params=pltpu.CompilerParams(
            dimension_semantics=("parallel", "parallel")
        ),
    )(seed_arr, x2)

    return out.reshape(x.shape)


if __name__ == "__main__":
    key = jax.random.PRNGKey(0)
    B, C, H, W = 2, 4, 16, 16
    x = jax.random.normal(key, (B, C, H, W), dtype=jnp.float32)
    p = 0.5

    y = jax.block_until_ready(dropout(x, p, seed=0))

    # sanity: every output is either 0 (dropped) or x/p (kept), and the mask
    # is shared across the batch dimension, matching the PyTorch semantics.
    ratio = y / jnp.where(x == 0, 1.0, x)
    ok_values = bool(
        jnp.all((jnp.abs(ratio) < 1e-6) | (jnp.abs(ratio - 1.0 / p) < 1e-5))
    )
    ok_shared = bool(jnp.all((y[0] != 0) == (y[1] != 0)))
    frac_kept = float(jnp.mean((y[0] != 0).astype(jnp.float32)))

    assert y.shape == x.shape and y.dtype == x.dtype
    assert ok_values and ok_shared
    assert 0.3 < frac_kept < 0.7  # ~p of the positions should be kept

    # fast paths (plain JAX, no pallas_call)
    y1 = jax.block_until_ready(dropout(x, 1.0))
    assert bool(jnp.allclose(y1, x))
    y0 = jax.block_until_ready(dropout(x, 0.0))
    assert bool(jnp.all(y0 == 0))

    print("KERNEL_OK")
</pallas_src>

<mosaic_0001>
module attributes {stable_mosaic.version = 11 : i64} {
  func.func @dropout_kernel(%arg0: i32, %arg1: i32, %arg2: memref<1xi32, #tpu.memory_space<smem>>, %arg3: memref<8x512xf32, #tpu.memory_space<vmem>>, %arg4: memref<8x512xf32, #tpu.memory_space<vmem>>) attributes {dimension_semantics = [#tpu.dimension_semantics<parallel>, #tpu.dimension_semantics<parallel>], iteration_bounds = array<i64: 1, 2>, scalar_prefetch = 1 : i64, scratch_operands = 0 : i64, tpu.core_type = #tpu.core_type<tc>, window_params = [{transform_indices = @transform_0, window_bounds = array<i64: 8, 512>}, {transform_indices = @transform_1, window_bounds = array<i64: 8, 512>}]} {
    %c512_i32 = arith.constant 512 : i32
    %0 = arith.muli %arg1, %c512_i32 : i32
    %1 = tpu.iota {dimensions = array<i32: 1>} : vector<1x512xi32>
    %2 = vector.broadcast %0 : i32 to vector<1x512xi32>
    %3 = arith.addi %1, %2 : vector<1x512xi32>
    %c0 = arith.constant 0 : index
    %4 = memref.load %arg2[%c0] : memref<1xi32, #tpu.memory_space<smem>>
    %c-1640531527_i32 = arith.constant -1640531527 : i32
    %5 = vector.broadcast %c-1640531527_i32 : i32 to vector<1x512xi32>
    %6 = arith.muli %3, %5 : vector<1x512xi32>
    %c-2048144789_i32 = arith.constant -2048144789 : i32
    %7 = arith.muli %4, %c-2048144789_i32 : i32
    %8 = vector.broadcast %7 : i32 to vector<1x512xi32>
    %9 = arith.addi %6, %8 : vector<1x512xi32>
    %c16_i32 = arith.constant 16 : i32
    %10 = vector.broadcast %c16_i32 : i32 to vector<1x512xi32>
    %11 = arith.shrui %9, %10 : vector<1x512xi32>
    %12 = arith.xori %9, %11 : vector<1x512xi32>
    %c2146121005_i32 = arith.constant 2146121005 : i32
    %13 = vector.broadcast %c2146121005_i32 : i32 to vector<1x512xi32>
    %14 = arith.muli %12, %13 : vector<1x512xi32>
    %c15_i32 = arith.constant 15 : i32
    %15 = vector.broadcast %c15_i32 : i32 to vector<1x512xi32>
    %16 = arith.shrui %14, %15 : vector<1x512xi32>
    %17 = arith.xori %14, %16 : vector<1x512xi32>
    %c-2073254261_i32 = arith.constant -2073254261 : i32
    %18 = vector.broadcast %c-2073254261_i32 : i32 to vector<1x512xi32>
    %19 = arith.muli %17, %18 : vector<1x512xi32>
    %c16_i32_0 = arith.constant 16 : i32
    %20 = vector.broadcast %c16_i32_0 : i32 to vector<1x512xi32>
    %21 = arith.shrui %19, %20 : vector<1x512xi32>
    %22 = arith.xori %19, %21 : vector<1x512xi32>
    %c1_i32 = arith.constant 1 : i32
    %23 = vector.broadcast %c1_i32 : i32 to vector<1x512xi32>
    %24 = arith.shrui %22, %23 : vector<1x512xi32>
    %c1073741824_i32 = arith.constant 1073741824 : i32
    %25 = vector.broadcast %c1073741824_i32 : i32 to vector<1x512xi32>
    %26 = arith.cmpi slt, %24, %25 : vector<1x512xi32>
    %cst = arith.constant 2.000000e+00 : f32
    %cst_1 = arith.constant 0.000000e+00 : f32
    %27 = vector.broadcast %cst : f32 to vector<1x512xf32>
    %28 = vector.broadcast %cst_1 : f32 to vector<1x512xf32>
    %29 = arith.select %26, %27, %28 : vector<1x512xi1>, vector<1x512xf32>
    %c0_2 = arith.constant 0 : index
    %c0_3 = arith.constant 0 : index
    %30 = vector.load %arg3[%c0_2, %c0_3] : memref<8x512xf32, #tpu.memory_space<vmem>>, vector<8x512xf32>
    %31 = vector.broadcast %29 : vector<1x512xf32> to vector<8x512xf32>
    %32 = arith.mulf %30, %31 : vector<8x512xf32>
    %c0_4 = arith.constant 0 : index
    %c0_5 = arith.constant 0 : index
    %33 = vector.load %arg4[%c0_4, %c0_5] : memref<8x512xf32, #tpu.memory_space<vmem>>, vector<8x512xf32>
    tpu.vector_store %arg4[%c0_4, %c0_5], %32 {strides = array<i32>} : memref<8x512xf32, #tpu.memory_space<vmem>>, vector<8x512xf32>,
    return
  }
  func.func @transform_0(%arg0: i32, %arg1: i32, %arg2: memref<1xi32, #tpu.memory_space<smem>>) -> (i32, i32) {
    %c0_i32 = arith.constant 0 : i32
    return %arg0, %arg1 : i32, i32
  }
  func.func @transform_1(%arg0: i32, %arg1: i32, %arg2: memref<1xi32, #tpu.memory_space<smem>>) -> (i32, i32) {
    %c0_i32 = arith.constant 0 : i32
    return %arg0, %arg1 : i32, i32
  }
}

</mosaic_0001>

<llo_original>
// kernel: tpu_custom_call.1
$region0: #{tpu_custom_call.1}
  #allocation0 [shape = 'u32[]', space=smem, size = 0x4, offset = 0x4, fixed_abs, tag = 'smem constant byte address 0x4 - core index']
  #allocation1 [shape = 'u32[72,128]{1,0:T(1,128)}', space=vmem, size = 0x9000, scoped, tag = 'internal scratch']
  #allocation2 [shape = 's32[1]{0}', space=sflag, size = 0x4, scoped, tag = 'scoped memory for tpu_custom_call.1']
  #allocation3 [shape = 's32[1]{0:T(128)S(6)}', space=smem, size = 0x200, scoped, tag = 'prefetched SMEM operand 0']
  %s0 = inlined_call_operand.<no memory space> [shape: s32[1], index: 0, kind: input, shape index: {}]
  %s1 = inlined_call_operand.hbm [shape: f32[2,1024], index: 1, kind: input, shape index: {}]
  %s2 = inlined_call_operand.hbm [shape: f32[2,1024], index: 2, kind: output, shape index: {}]
  %s3 = sld [smem:[#allocation0]]
  $region41: #{tpu_custom_call.1} parent=0
    _
  %s5 = ssub.s32 1, %s3
  %s6 = scalar_select 0, %s5, %s3
  %7 = sst [smem:[#allocation3]] %s0
  $region1: #{tpu_custom_call.1} parent=0
    #allocation4 [shape = 'u8[32768]{0}', space=vmem, size = 0x8000, scoped, tag = 'input window, operand 1']
    #allocation5 [shape = 's32[2]{0}', space=sflag, size = 0x8, scoped, tag = 'scoped memory for tpu_custom_call.1']
    #allocation6 [shape = 's32[2]{0}', space=sflag, size = 0x8, scoped, tag = 'scoped memory for tpu_custom_call.1']
    #allocation7 [shape = 'u8[32768]{0}', space=vmem, size = 0x8000, scoped, tag = 'output window, operand 0']
    %8 = vsyncpa [#allocation5], 0
    %s9 = scalar_lea.sflag [#allocation5], 1
    %10 = vsyncpa %s9, 0
    %11 = vsyncpa [#allocation6], 0
    %s12 = scalar_lea.sflag [#allocation6], 1
    %13 = vsyncpa %s12, 0
    loop: start=0, step=1, limit=4
    $region2: #{tpu_custom_call.1} parent=1 // loop_pre_header
      _
    $region3: #{tpu_custom_call.1} parent=1 // loop_header
      %s15 = sphi 0, %s19
      %p16 = scmp.ge.s32.totalorder %s15, 4
      %s22 = sphi 0, %s34
      %s23 = sphi 0, %s30
      %s24 = sphi 0, %s22
      %s25 = sphi 0, %s23
      %s26 = sphi 0, %s24
      %s27 = sphi 0, %s25
      %s39 = sphi 0, %s41
      %s42 = sphi 0, %s39
      %s43 = sphi 0, %s42
      %s59 = sphi 0, %s43
      %s67 = sphi 0, %s69
      %s70 = sphi 0, %s67
      %s71 = sphi 0, %s70
      %s87 = sphi 0, %s71
    $region4: #{tpu_custom_call.1} parent=1 // loop_header_branch
      %18 = sbr.rel (%p16) target = $region8
    $region5: #{tpu_custom_call.1} parent=1 // loop_body
      %s20 = ssub.s32 %s15, 1
      %s21 = ssub.s32 %s15, 2
      %s28 = sadd.s32 1, %s23
      %p29 = scmp.ge.s32.totalorder %s28, 2
      %s30 = scalar_select %p29, 0, %s28
      %s31 = sadd.s32 1, %s22
      %s32 = scalar_select %p29, %s31, %s22
      %p33 = scmp.ge.s32.totalorder %s32, 1
      %s34 = scalar_select %p33, 0, %s32
      %s35 = ssub.s32 %s22, %s34
      %s36 = ssub.s32 %s23, %s30
      %s37 = sor.u32 %s35, %s36
      %p38 = scmp.eq.s32.totalorder %s37, 0
      %s40 = sadd.s32 %s39, 1
      %s41 = scalar_select %p38, %s39, %s40
      %p44 = pneg %p38
      %p45 = scmp.eq.s32.totalorder %s15, 1
      %p46 = por %p44, %p45
      %p47 = scmp.ne.s32.totalorder %s39, %s42
      %p48 = scmp.eq.s32.totalorder %s15, 0
      %p49 = por %p47, %p48
      %p50 = scmp.ne.s32.totalorder %s39, %s42
      %p51 = scmp.eq.s32.totalorder %s20, 1
      %p52 = por %p50, %p51
      %p53 = scmp.ne.s32.totalorder %s42, %s43
      %p54 = scmp.eq.s32.totalorder %s20, 0
      %p55 = por %p53, %p54
      %p56 = scmp.ne.s32.totalorder %s42, %s43
      %p57 = scmp.eq.s32.totalorder %s21, 1
      %p58 = por %p56, %p57
      %p60 = scmp.ne.s32.totalorder %s43, %s59
      %p61 = scmp.eq.s32.totalorder %s21, 0
      %p62 = por %p60, %p61
      %s63 = ssub.s32 %s22, %s34
      %s64 = ssub.s32 %s23, %s30
      %s65 = sor.u32 %s63, %s64
      %p66 = scmp.eq.s32.totalorder %s65, 0
      %s68 = sadd.s32 %s67, 1
      %s69 = scalar_select %p66, %s67, %s68
      %p72 = pneg %p66
      %p73 = scmp.eq.s32.totalorder %s15, 1
      %p74 = por %p72, %p73
      %p75 = scmp.ne.s32.totalorder %s67, %s70
      %p76 = scmp.eq.s32.totalorder %s15, 0
      %p77 = por %p75, %p76
      %p78 = scmp.ne.s32.totalorder %s67, %s70
      %p79 = scmp.eq.s32.totalorder %s20, 1
      %p80 = por %p78, %p79
      %p81 = scmp.ne.s32.totalorder %s70, %s71
      %p82 = scmp.eq.s32.totalorder %s20, 0
      %p83 = por %p81, %p82
      %p84 = scmp.ne.s32.totalorder %s70, %s71
      %p85 = scmp.eq.s32.totalorder %s21, 1
      %p86 = por %p84, %p85
      %p88 = scmp.ne.s32.totalorder %s71, %s87
      %p89 = scmp.eq.s32.totalorder %s21, 0
      %p90 = por %p88, %p89
      %p91 = scmp.le.s32.totalorder 1, %s15
      %p92 = scmp.lt.s32.totalorder %s15, 3
      %p93 = pnand %p91, %p92
      %p94 = pneg %p93
      // Predicated region
      $region9: #{tpu_custom_call.1} parent=5 // pred_check
        _
      $region10: #{tpu_custom_call.1} parent=5 // pred_check_branch
        %96 = sbr.rel (%p93) target = $region12
      $region11: #{tpu_custom_call.1} parent=5 // pred_region
        %s97 = ssub.s32 %s15, 1
      $region12: #{tpu_custom_call.1} parent=5 // pred_fallthru
        _
      %p98 = scmp.lt.s32.totalorder %s15, 2
      // Predicated region
      $region13: #{tpu_custom_call.1} parent=5 // pred_check
        %p99 = pneg %p98
      $region14: #{tpu_custom_call.1} parent=5 // pred_check_branch
        %101 = sbr.rel (%p99) target = $region16
      $region15: #{tpu_custom_call.1} parent=5 // pred_region
        // Predicated region
        $region17: #{tpu_custom_call.1} parent=15 // pred_check
          %p102 = pneg %p49
        $region18: #{tpu_custom_call.1} parent=15 // pred_check_branch
          %104 = sbr.rel (%p102) target = $region20
        $region19: #{tpu_custom_call.1} parent=15 // pred_region
          %s105 = sand.u32 %s39, 1
          %s106 = scalar_lea.sflag [#allocation5], %s105
          %s107 = sand.u32 %s39, 1
          %s108 = smul.addr %s107, 32
          %s109 = scalar_lea.vmem [#allocation4], %s108
          %s110 = smul.u32 4, %s22
          %s111 = smul.u32 4, %s23
          %s112 = ssub.s32 1, %s110
          %s113 = smul.u32 2, %s112
          %s114 = smul.u32 %s113, 4
          %s115 = ssub.s32 32, %s114
          %s116 = sshll.u32 %s115, 4
          %117 = vsyncadd %s106, %s116
          %p118 = scmp.ne.s32.totalorder 0, %s114
          %s119 = smul.addr %s110, 8
          %s120 = sadd.s32 %s111, %s119
          %s121 = smul.addr %s120, 2
          %s122 = scalar_lea.hbm %s1, %s121
          %s123 = smul.u32 8, %s112
          %s124 = sshll.u32 %s122, 4
          %s125 = int_to_ptr.hbm [resolvable:$true] %s124
          %s126 = sshll.u32 %s109, 4
          %s127 = int_to_ptr.vmem [resolvable:$true] %s126
          %s128 = sshll.u32 %s123, 4
          %132 = dma.hbm_to_vmem [thread:$0]  (%p118), %s125, %s128, %s127, %s106, 256, 128, 8
        $region20: #{tpu_custom_call.1} parent=15 // pred_fallthru
          _
      $region16: #{tpu_custom_call.1} parent=5 // pred_fallthru
        _
      %p133 = scmp.le.s32.totalorder 1, %s15
      %p134 = scmp.lt.s32.totalorder %s15, 3
      %p135 = pnand %p133, %p134
      %p136 = pneg %p135
      // Predicated region
      $region21: #{tpu_custom_call.1} parent=5 // pred_check
        _
      $region22: #{tpu_custom_call.1} parent=5 // pred_check_branch
        %138 = sbr.rel (%p135) target = $region24
      $region23: #{tpu_custom_call.1} parent=5 // pred_region
        %s139 = ssub.s32 %s15, 1
        %s140 = sand.u32 %s42, 1
        %s141 = scalar_lea.sflag [#allocation5], %s140
        %s142 = sand.u32 %s42, 1
        %s143 = smul.addr %s142, 32
        %s144 = scalar_lea.vmem [#allocation4], %s143
        // Predicated region
        $region25: #{tpu_custom_call.1} parent=23 // pred_check
          %p145 = pneg %p55
        $region26: #{tpu_custom_call.1} parent=23 // pred_check_branch
          %147 = sbr.rel (%p145) target = $region28
        $region27: #{tpu_custom_call.1} parent=23 // pred_region
          %149 = dma.done %s141, 512
        $region28: #{tpu_custom_call.1} parent=23 // pred_fallthru
          _
        %s150 = sand.u32 %s42, 1
        %s151 = scalar_lea.sflag [#allocation5], %s150
        %s152 = sand.u32 %s42, 1
        %s153 = smul.addr %s152, 32
        %s154 = scalar_lea.vmem [#allocation4], %s153
        %p155 = pneg %p55
        %p156 = pneg %p52
        %p157 = pneg %p83
        %p158 = pneg %p80
        %s159 = sand.u32 %s70, 1
        %s160 = scalar_lea.sflag [#allocation6], %s159
        %s161 = sand.u32 %s70, 1
        %s162 = smul.addr %s161, 32
        %s163 = scalar_lea.vmem [#allocation7], %s162
        %s164 = smul.u32 4, %s24
        %s165 = smul.u32 4, %s25
        %s166 = ssub.s32 1, %s164
        %s167 = smul.u32 2, %s166
        %s168 = smul.u32 %s167, 4
        %s169 = smul.u32 4, %s24
        %s170 = smul.u32 4, %s25
        %s171 = ssub.s32 1, %s169
        %s172 = smul.u32 2, %s171
        %s173 = smul.u32 %s172, 4
        %s174 = smul.u32 %s25, 512
        %v175 = vlaneseq
        %v176 = vand.u32 %v175, 127
        %v177 = vadd.s32 %v176, 128
        %v178 = vadd.s32 %v176, 256
        %v179 = vadd.s32 %v176, 384
        %v180 = vstv %s174
        %v181 = vadd.s32 %v176, %v180
        %v182 = vadd.s32 %v177, %v180
        %v183 = vadd.s32 %v178, %v180
        %v184 = vadd.s32 %v179, %v180
        %s185 = sld [smem:[#allocation3]]
        %v186 = vmul.u32 %v181, 2654435769
        %v187 = vmul.u32 %v182, 2654435769
        %v188 = vmul.u32 %v183, 2654435769
        %v189 = vmul.u32 %v184, 2654435769
        %s190 = smul.u32 %s185, 2246822507
        %v191 = vstv %s190
        %v192 = vadd.s32 %v186, %v191
        %v193 = vadd.s32 %v187, %v191
        %v194 = vadd.s32 %v188, %v191
        %v195 = vadd.s32 %v189, %v191
        %v196 = vshrl.u32 %v192, 16
        %v197 = vshrl.u32 %v193, 16
        %v198 = vshrl.u32 %v194, 16
        %v199 = vshrl.u32 %v195, 16
        %v200 = vxor.u32 %v192, %v196
        %v201 = vxor.u32 %v193, %v197
        %v202 = vxor.u32 %v194, %v198
        %v203 = vxor.u32 %v195, %v199
        %v204 = vmul.u32 %v200, 2146121005
        %v205 = vmul.u32 %v201, 2146121005
        %v206 = vmul.u32 %v202, 2146121005
        %v207 = vmul.u32 %v203, 2146121005
        %v208 = vshrl.u32 %v204, 15
        %v209 = vshrl.u32 %v205, 15
        %v210 = vshrl.u32 %v206, 15
        %v211 = vshrl.u32 %v207, 15
        %v212 = vxor.u32 %v204, %v208
        %v213 = vxor.u32 %v205, %v209
        %v214 = vxor.u32 %v206, %v210
        %v215 = vxor.u32 %v207, %v211
        %v216 = vmul.u32 %v212, 2221713035
        %v217 = vmul.u32 %v213, 2221713035
        %v218 = vmul.u32 %v214, 2221713035
        %v219 = vmul.u32 %v215, 2221713035
        %v220 = vshrl.u32 %v216, 16
        %v221 = vshrl.u32 %v217, 16
        %v222 = vshrl.u32 %v218, 16
        %v223 = vshrl.u32 %v219, 16
        %v224 = vxor.u32 %v216, %v220
        %v225 = vxor.u32 %v217, %v221
        %v226 = vxor.u32 %v218, %v222
        %v227 = vxor.u32 %v219, %v223
        %v228 = vshrl.u32 %v224, 1
        %v229 = vshrl.u32 %v225, 1
        %v230 = vshrl.u32 %v226, 1
        %v231 = vshrl.u32 %v227, 1
        %vm232 = vcmp.lt.s32.totalorder %v228, 1073741824
        %vm233 = vcmp.lt.s32.totalorder %v229, 1073741824
        %vm234 = vcmp.lt.s32.totalorder %v230, 1073741824
        %vm235 = vcmp.lt.s32.totalorder %v231, 1073741824
        %v236 = vsel %vm232, 2.0, 0.0
        %v237 = vsel %vm233, 2.0, 0.0
        %v238 = vsel %vm234, 2.0, 0.0
        %v239 = vsel %vm235, 2.0, 0.0
        %v240 = vld [vmem:[%s144] sm:$0xff]
        %v241 = vld [vmem:[%s144 + $0x8] sm:$0xff]
        %v242 = vld [vmem:[%s144 + $0x10] sm:$0xff]
        %v243 = vld [vmem:[%s144 + $0x18] sm:$0xff]
        %v248 = vrot.slane %v237, 6
        %v249 = vrot.slane %v238, 4
        %v250 = vrot.slane %v239, 2
        %vm251 = vcmask 1041408
        %v252 = vsel %vm251, %v236, %v248
        %vm253 = vcmask 1045508
        %v254 = vsel %vm253, %v249, %v250
        %vm255 = vcmask 1043456
        %v256 = vsel %vm255, %v252, %v254
        %vm257 = vcmask 1043458
        %v258 = vsel %vm257, %v236, %v248
        %vm259 = vcmask 1045504
        %v260 = vsel %vm259, %v250, %v249
        %vm261 = vcmask 1045506
        %v262 = vsel %vm261, %v258, %v260
        %v263 = vrot.slane %v262, 2
        %v264 = vsel %vm253, %v236, %v248
        %v265 = vsel %vm251, %v249, %v250
        %v266 = vsel %vm255, %v265, %v264
        %v267 = vrot.slane %v266, 4
        %v268 = vsel %vm259, %v248, %v236
        %v269 = vsel %vm257, %v249, %v250
        %v270 = vsel %vm261, %v269, %v268
        %v271 = vrot.slane %v270, 6
        %v276 = vmul.f32 %v240, %v256
        %v277 = vmul.f32 %v241, %v263
        %v278 = vmul.f32 %v242, %v267
        %v279 = vmul.f32 %v243, %v271
        %280 = vst [vmem:[%s163] sm:$0xff] %v276
        %281 = vst [vmem:[%s163 + $0x8] sm:$0xff] %v277
        %282 = vst [vmem:[%s163 + $0x10] sm:$0xff] %v278
        %283 = vst [vmem:[%s163 + $0x18] sm:$0xff] %v279
        %s284 = sand.u32 %s70, 1
        %s285 = scalar_lea.sflag [#allocation6], %s284
        %s286 = sand.u32 %s70, 1
        %s287 = smul.addr %s286, 32
        %s288 = scalar_lea.vmem [#allocation7], %s287
        // Predicated region
        $region29: #{tpu_custom_call.1} parent=23 // pred_check
          %p289 = pneg %p80
        $region30: #{tpu_custom_call.1} parent=23 // pred_check_branch
          %291 = sbr.rel (%p289) target = $region32
        $region31: #{tpu_custom_call.1} parent=23 // pred_region
          %s292 = smul.u32 4, %s24
          %s293 = smul.u32 4, %s25
          %s294 = ssub.s32 1, %s292
          %s295 = smul.u32 2, %s294
          %s296 = smul.u32 %s295, 4
          %s297 = ssub.s32 32, %s296
          %s298 = sshll.u32 %s297, 4
          %299 = vsyncadd %s285, %s298
          %p300 = scmp.ne.s32.totalorder 0, %s296
          %s301 = smul.addr %s292, 8
          %s302 = sadd.s32 %s293, %s301
          %s303 = smul.addr %s302, 2
          %s304 = scalar_lea.hbm %s2, %s303
          %s305 = smul.u32 8, %s294
          %s306 = sshll.u32 %s288, 4
          %s307 = int_to_ptr.vmem [resolvable:$true] %s306
          %s308 = sshll.u32 %s304, 4
          %s309 = int_to_ptr.hbm [resolvable:$true] %s308
          %s310 = sshll.u32 %s305, 4
          %314 = dma.vmem_to_hbm [thread:$0]  (%p300), %s307, %s310, %s309, %s285, 128, 256, 8
        $region32: #{tpu_custom_call.1} parent=23 // pred_fallthru
          _
      $region24: #{tpu_custom_call.1} parent=5 // pred_fallthru
        _
      %p315 = scmp.le.s32.totalorder 2, %s15
      // Predicated region
      $region33: #{tpu_custom_call.1} parent=5 // pred_check
        %p316 = pneg %p315
      $region34: #{tpu_custom_call.1} parent=5 // pred_check_branch
        %318 = sbr.rel (%p316) target = $region36
      $region35: #{tpu_custom_call.1} parent=5 // pred_region
        %s319 = ssub.s32 %s15, 2
        // Predicated region
        $region37: #{tpu_custom_call.1} parent=35 // pred_check
          %p320 = pneg %p86
        $region38: #{tpu_custom_call.1} parent=35 // pred_check_branch
          %322 = sbr.rel (%p320) target = $region40
        $region39: #{tpu_custom_call.1} parent=35 // pred_region
          %s323 = sand.u32 %s71, 1
          %s324 = scalar_lea.sflag [#allocation6], %s323
          %s325 = sand.u32 %s71, 1
          %s326 = smul.addr %s325, 32
          %s327 = scalar_lea.vmem [#allocation7], %s326
          %329 = dma.done %s324, 512
        $region40: #{tpu_custom_call.1} parent=35 // pred_fallthru
          _
      $region36: #{tpu_custom_call.1} parent=5 // pred_fallthru
        _
    $region6: #{tpu_custom_call.1} parent=1 // loop_footer
      %s19 = sadd.s32 1, %s15
    $region7: #{tpu_custom_call.1} parent=1 // loop_footer_branch
      %14 = sbr.rel target = $region3
    $region8: #{tpu_custom_call.1} parent=1 // loop_exit
      _
    %330 = vsyncpa [#allocation5], 1
    %s331 = scalar_lea.sflag [#allocation5], 1
    %332 = vsyncpa %s331, 1
    %333 = vsyncpa [#allocation6], 1
    %s334 = scalar_lea.sflag [#allocation6], 1
    %335 = vsyncpa %s334, 1

</llo_original>
